<compile_context>
chip_gen: v7x
topology: tpu7x:2x2x1
jax: 0.10.0
libtpu: 0.0.40
codegen_flags: <defaults>
</compile_context>

<pallas_src>
import jax
import jax.numpy as jnp
from jax.experimental import pallas as pl
from jax.experimental.pallas import tpu as pltpu

# Hyperparameters from the PyTorch module __init__ (no learned parameters).
GAMMA_BASE = 2.0
BETA = 5.0
ALPHA = 0.25
EPS = 1e-5

LANES = 128
MAX_TILE_ROWS = 2048                  # up to 1 MiB f32 per input per grid step
SPLIT = 2                             # leading "parallel" axis -> per-core accumulator blocks
VMEM_LIMIT_BYTES = 32 * 1024 * 1024   # explicit scoped-VMEM limit (safe on v5e..v7x)
INPUT_VMEM_BUDGET = 24 * 1024 * 1024  # cap on double-buffered input tiles

_SUBLANE_BY_ITEMSIZE = {4: 8, 2: 16, 1: 32}


def _make_kernel(num_preds, tile_rows):
    groups = tile_rows // 8

    def _partial(v):
        # (tile_rows, 128) -> (8, 128): sum over the leading axis of the vreg view.
        # Pure elementwise vreg adds (VALU); no per-step cross-lane/sublane XLU work.
        return jnp.sum(v.reshape(groups, 8, LANES), axis=0)

    def kernel(tgt_ref, *rest):
        pred_refs = rest[:num_preds]
        out_ref = rest[num_preds]            # (Q, 8, 128) resident accumulator block

        # Zero this core's accumulators on its first row-tile.
        @pl.when(pl.program_id(1) == 0)
        def _():
            out_ref[...] = jnp.zeros_like(out_ref)

        t = tgt_ref[...].astype(jnp.float32)
        out_ref[1] += _partial(t)            # sum(target) — shared by every dice term

        for p_idx, pred_ref in enumerate(pred_refs):
            x = pred_ref[...].astype(jnp.float32)
            # One EUP exp serves the sigmoid, the BCE softplus and the focal log term.
            e = jnp.exp(-jnp.abs(x))
            inv = 1.0 / (1.0 + e)
            prob = jnp.where(x >= 0.0, inv, e * inv)        # sigmoid(x)

            out_ref[2 + 2 * p_idx] += _partial(prob * t)    # dice intersection
            out_ref[3 + 2 * p_idx] += _partial(prob)        # dice sum(sigmoid(pred))

            if p_idx == 0:
                # Dynamic focal loss: only the final prediction needs it.
                m = jnp.maximum(x, 0.0)
                lse = jnp.log1p(e)                           # EUP
                bce = m - x * t + lse                        # stable BCE-with-logits
                is_pos = t == 1.0                            # matches torch.where(target == 1, ...)
                one_m_pt = jnp.where(is_pos, 1.0 - prob, prob)
                gamma = GAMMA_BASE + BETA * one_m_pt
                # log(1 - pt) rebuilt from the softplus pieces already computed for bce:
                #   t == 1: log(1 - sigmoid(x)) = -(max(x,0)     + log1p(e))
                #   else  : log(    sigmoid(x)) = -(max(x,0) - x + log1p(e))
                log1mpt = -(jnp.where(is_pos, m, m - x) + lse)
                pow_term = jnp.exp(gamma * log1mpt)          # == (1 - pt) ** gamma, one EUP op
                alpha_w = (1.0 - ALPHA) + (2.0 * ALPHA - 1.0) * t
                out_ref[0] += _partial(alpha_w * pow_term * bce)

    return kernel


def _jax_sums(targets_flat, pred_flats):
    """Same Q-vector of partial sums in plain JAX (used for the small tail / tiny inputs)."""
    t = targets_flat.astype(jnp.float32)
    x0 = pred_flats[0].astype(jnp.float32)
    p0 = jax.nn.sigmoid(x0)
    pt = jnp.where(t == 1.0, p0, 1.0 - p0)
    gamma = GAMMA_BASE + BETA * (1.0 - pt)
    fw = (ALPHA * t + (1.0 - ALPHA) * (1.0 - t)) * jnp.power(1.0 - pt, gamma)
    bce = jnp.maximum(x0, 0.0) - x0 * t + jnp.log1p(jnp.exp(-jnp.abs(x0)))
    out = [jnp.sum(fw * bce), jnp.sum(t)]
    for x in pred_flats:
        p = jax.nn.sigmoid(x.astype(jnp.float32))
        out.append(jnp.sum(p * t))
        out.append(jnp.sum(p))
    return jnp.stack(out)


def _fused_loss_sums(targets, preds):
    """One fused pallas_call over target + all predictions (plus a tiny JAX tail).

    Returns a (Q,) f32 vector with Q = 2 + 2 * len(preds):
      [0]        sum(focal_weight * bce)  for preds[0]
      [1]        sum(target)
      [2 + 2*p]  sum(sigmoid(preds[p]) * target)
      [3 + 2*p]  sum(sigmoid(preds[p]))
    """
    num_preds = len(preds)
    q = 2 + 2 * num_preds
    total = targets.size

    arrays = [targets] + list(preds)
    # Sublane granularity from the narrowest dtype (f32 -> 8, bf16 -> 16, int8/fp8 -> 32).
    sub = max(_SUBLANE_BY_ITEMSIZE.get(jnp.dtype(a.dtype).itemsize, 8) for a in arrays)

    rows = total // LANES
    rem = total - rows * LANES

    # Tile size: as big as possible while (num_preds+1) double-buffered tiles fit the budget.
    bytes_per_row = sum(LANES * jnp.dtype(a.dtype).itemsize for a in arrays)
    budget_rows = (INPUT_VMEM_BUDGET // (2 * bytes_per_row)) // sub * sub
    tile_rows = min(MAX_TILE_ROWS, max(budget_rows, sub), (rows // SPLIT) // sub * sub)

    t_flat = targets.reshape(-1)
    p_flats = [p.reshape(-1) for p in preds]

    if tile_rows < sub:
        # Too small for one pipelined tile per core: do everything in plain JAX.
        return _jax_sums(t_flat, p_flats)

    tiles_per_split = (rows // tile_rows) // SPLIT
    covered_rows = SPLIT * tiles_per_split * tile_rows
    covered = covered_rows * LANES

    if rem == 0:
        # Free reshape (no HBM copy); the grid only ever touches the first covered_rows rows.
        main = [a.reshape(rows, LANES) for a in [t_flat] + p_flats]
    else:
        # Rare case (numel not a multiple of 128): slice the 2-D prefix once.
        main = [a[:covered].reshape(covered_rows, LANES) for a in [t_flat] + p_flats]

    in_spec = pl.BlockSpec((tile_rows, LANES),
                           lambda c, r: (c * tiles_per_split + r, 0))

    partials = pl.pallas_call(
        _make_kernel(num_preds, tile_rows),
        out_shape=jax.ShapeDtypeStruct((SPLIT, q, 8, LANES), jnp.float32),
        grid_spec=pltpu.PrefetchScalarGridSpec(
            num_scalar_prefetch=0,
            grid=(SPLIT, tiles_per_split),
            in_specs=[in_spec] * (num_preds + 1),
            out_specs=pl.BlockSpec((None, q, 8, LANES), lambda c, r: (c, 0, 0, 0)),
        ),
        compiler_params=pltpu.CompilerParams(
            dimension_semantics=("parallel", "arbitrary"),
            vmem_limit_bytes=VMEM_LIMIT_BYTES,
        ),
    )(*main)

    # Tiny final cross-lane/sublane + cross-core reduction in JAX glue.
    sums = jnp.sum(partials, axis=(0, 2, 3))

    if covered < total:
        # Small unaligned tail (< SPLIT*tile_rows*128 + 128 elements): plain JAX reduction.
        sums = sums + _jax_sums(t_flat[covered:], [p[covered:] for p in p_flats])
    return sums


def multi_stage_loss(outputs, targets):
    """outputs = (final_pred, [aux_pred_0, ...]); all predictions same shape as targets."""
    final_pred, aux_preds = outputs
    preds = [final_pred] + list(aux_preds)
    sums = _fused_loss_sums(targets, preds)

    n = final_pred.size
    tsum = sums[1]

    def dice(inter, psum):
        return 1.0 - (2.0 * inter + EPS) / (psum + tsum + EPS)

    loss = sums[0] / n + dice(sums[2], sums[3])          # focal(final) + dice(final)
    for p in range(1, len(preds)):
        loss = loss + 0.5 * dice(sums[2 + 2 * p], sums[3 + 2 * p])
    return loss


# ---------------- pure-JAX reference (for correctness check) ----------------
def _ref_focal(pred, target):
    p = jax.nn.sigmoid(pred)
    pt = jnp.where(target == 1.0, p, 1.0 - p)
    gamma = GAMMA_BASE + BETA * (1.0 - pt)
    fw = (ALPHA * target + (1.0 - ALPHA) * (1.0 - target)) * jnp.power(1.0 - pt, gamma)
    bce = jnp.maximum(pred, 0.0) - pred * target + jnp.log1p(jnp.exp(-jnp.abs(pred)))
    return jnp.mean(fw * bce)


def _ref_dice(pred, target):
    p = jax.nn.sigmoid(pred)
    inter = jnp.sum(p * target)
    union = jnp.sum(p) + jnp.sum(target)
    return 1.0 - (2.0 * inter + EPS) / (union + EPS)


def _ref_multi_stage(outputs, targets):
    final_pred, aux_preds = outputs
    loss = _ref_focal(final_pred, targets) + _ref_dice(final_pred, targets)
    for aux in aux_preds:
        loss = loss + 0.5 * _ref_dice(aux, targets)
    return loss


if __name__ == "__main__":
    key = jax.random.PRNGKey(0)
    keys = jax.random.split(key, 8)

    loss_fn = jax.jit(multi_stage_loss)

    # --- Test 1: f32, canonical small NCHW shape (kernel covers everything, no tail).
    shape = (2, 4, 16, 16)
    final_pred = jax.random.normal(keys[0], shape, dtype=jnp.float32)
    aux_preds = [jax.random.normal(keys[1], shape, dtype=jnp.float32),
                 jax.random.normal(keys[2], shape, dtype=jnp.float32)]
    targets = (jax.random.uniform(keys[3], shape) > 0.5).astype(jnp.float32)

    loss = jax.block_until_ready(loss_fn((final_pred, aux_preds), targets))
    ref = _ref_multi_stage((final_pred, aux_preds), targets)
    assert jnp.allclose(loss, ref, rtol=1e-5, atol=1e-5), (loss, ref)

    # --- Test 2: bf16 predictions + odd numel (exercises the no-pad prefix + JAX tail path).
    shape2 = (2, 4, 29, 29)
    fp2 = jax.random.normal(keys[4], shape2, dtype=jnp.float32).astype(jnp.bfloat16)
    ap2 = [jax.random.normal(keys[5], shape2, dtype=jnp.float32).astype(jnp.bfloat16)]
    tg2 = (jax.random.uniform(keys[6], shape2) > 0.5).astype(jnp.float32)

    loss2 = jax.block_until_ready(loss_fn((fp2, ap2), tg2))
    ref2 = _ref_multi_stage((fp2.astype(jnp.float32),
                             [a.astype(jnp.float32) for a in ap2]), tg2)
    assert jnp.allclose(loss2, ref2, rtol=1e-4, atol=1e-5), (loss2, ref2)

    print("KERNEL_OK")
</pallas_src>

<mosaic_0001>
module attributes {stable_mosaic.version = 11 : i64} {
  func.func @kernel(%arg0: i32, %arg1: i32, %arg2: memref<8x128xf32, #tpu.memory_space<vmem>>, %arg3: memref<8x128xf32, #tpu.memory_space<vmem>>, %arg4: memref<8x128xf32, #tpu.memory_space<vmem>>, %arg5: memref<8x128xf32, #tpu.memory_space<vmem>>, %arg6: memref<1x8x8x128xf32, #tpu.memory_space<vmem>>) attributes {dimension_semantics = [#tpu.dimension_semantics<parallel>, #tpu.dimension_semantics<arbitrary>], iteration_bounds = array<i64: 2, 1>, scalar_prefetch = 0 : i64, scratch_operands = 0 : i64, tpu.core_type = #tpu.core_type<tc>, window_params = [{transform_indices = @transform_0, window_bounds = array<i64: 8, 128>}, {transform_indices = @transform_1, window_bounds = array<i64: 8, 128>}, {transform_indices = @transform_2, window_bounds = array<i64: 8, 128>}, {transform_indices = @transform_3, window_bounds = array<i64: 8, 128>}, {transform_indices = @transform_4, window_bounds = array<i64: 1, 8, 8, 128>}]} {
    %c0_i32 = arith.constant 0 : i32
    %0 = arith.cmpi eq, %arg1, %c0_i32 : i32
    %1 = arith.extui %0 : i1 to i32
    %c0_i32_0 = arith.constant 0 : i32
    %2 = arith.cmpi ne, %1, %c0_i32_0 : i32
    scf.if %2 {
      %cst_92 = arith.constant 0.000000e+00 : f32
      %138 = vector.broadcast %cst_92 : f32 to vector<8x8x128xf32>
      %c0_93 = arith.constant 0 : index
      %c0_94 = arith.constant 0 : index
      %c0_95 = arith.constant 0 : index
      %c0_96 = arith.constant 0 : index
      %139 = vector.load %arg6[%c0_93, %c0_94, %c0_95, %c0_96] : memref<1x8x8x128xf32, #tpu.memory_space<vmem>>, vector<1x8x8x128xf32>
      %140 = vector.shape_cast %139 : vector<1x8x8x128xf32> to vector<8x8x128xf32>
      %141 = vector.shape_cast %138 : vector<8x8x128xf32> to vector<1x8x8x128xf32>
      tpu.vector_store %arg6[%c0_93, %c0_94, %c0_95, %c0_96], %141 {strides = array<i32>} : memref<1x8x8x128xf32, #tpu.memory_space<vmem>>, vector<1x8x8x128xf32>,
    } else {
    }
    %c0 = arith.constant 0 : index
    %c0_1 = arith.constant 0 : index
    %3 = vector.load %arg2[%c0, %c0_1] : memref<8x128xf32, #tpu.memory_space<vmem>>, vector<8x128xf32>
    %c0_2 = arith.constant 0 : index
    %c1 = arith.constant 1 : index
    %c0_3 = arith.constant 0 : index
    %c0_4 = arith.constant 0 : index
    %4 = vector.load %arg6[%c0_2, %c1, %c0_3, %c0_4] : memref<1x8x8x128xf32, #tpu.memory_space<vmem>>, vector<1x1x8x128xf32>
    %5 = vector.shape_cast %4 : vector<1x1x8x128xf32> to vector<8x128xf32>
    %6 = vector.shape_cast %3 : vector<8x128xf32> to vector<1x8x128xf32>
    %cst = arith.constant dense<0.000000e+00> : vector<8x128xf32>
    %7 = vector.multi_reduction <add>, %6, %cst [0] : vector<1x8x128xf32> to vector<8x128xf32>
    %8 = arith.addf %5, %7 : vector<8x128xf32>
    %c0_5 = arith.constant 0 : index
    %c1_6 = arith.constant 1 : index
    %c0_7 = arith.constant 0 : index
    %c0_8 = arith.constant 0 : index
    %9 = vector.load %arg6[%c0_5, %c1_6, %c0_7, %c0_8] : memref<1x8x8x128xf32, #tpu.memory_space<vmem>>, vector<1x1x8x128xf32>
    %10 = vector.shape_cast %9 : vector<1x1x8x128xf32> to vector<8x128xf32>
    %11 = vector.shape_cast %8 : vector<8x128xf32> to vector<1x1x8x128xf32>
    tpu.vector_store %arg6[%c0_5, %c1_6, %c0_7, %c0_8], %11 {strides = array<i32>} : memref<1x8x8x128xf32, #tpu.memory_space<vmem>>, vector<1x1x8x128xf32>,
    %c0_9 = arith.constant 0 : index
    %c0_10 = arith.constant 0 : index
    %12 = vector.load %arg3[%c0_9, %c0_10] : memref<8x128xf32, #tpu.memory_space<vmem>>, vector<8x128xf32>
    %13 = math.absf %12 : vector<8x128xf32>
    %cst_11 = arith.constant 0.000000e+00 : f32
    %14 = vector.broadcast %cst_11 : f32 to vector<8x128xf32>
    %15 = arith.subf %14, %13 : vector<8x128xf32>
    %16 = math.exp %15 : vector<8x128xf32>
    %cst_12 = arith.constant 1.000000e+00 : f32
    %17 = vector.broadcast %cst_12 : f32 to vector<8x128xf32>
    %18 = arith.addf %17, %16 : vector<8x128xf32>
    %cst_13 = arith.constant 1.000000e+00 : f32
    %19 = vector.broadcast %cst_13 : f32 to vector<8x128xf32>
    %20 = arith.divf %19, %18 : vector<8x128xf32>
    %cst_14 = arith.constant 0.000000e+00 : f32
    %21 = vector.broadcast %cst_14 : f32 to vector<8x128xf32>
    %22 = arith.cmpf oge, %12, %21 : vector<8x128xf32>
    %23 = arith.mulf %16, %20 : vector<8x128xf32>
    %24 = arith.select %22, %20, %23 : vector<8x128xi1>, vector<8x128xf32>
    %c0_15 = arith.constant 0 : index
    %c2 = arith.constant 2 : index
    %c0_16 = arith.constant 0 : index
    %c0_17 = arith.constant 0 : index
    %25 = vector.load %arg6[%c0_15, %c2, %c0_16, %c0_17] : memref<1x8x8x128xf32, #tpu.memory_space<vmem>>, vector<1x1x8x128xf32>
    %26 = vector.shape_cast %25 : vector<1x1x8x128xf32> to vector<8x128xf32>
    %27 = arith.mulf %24, %3 : vector<8x128xf32>
    %28 = vector.shape_cast %27 : vector<8x128xf32> to vector<1x8x128xf32>
    %cst_18 = arith.constant dense<0.000000e+00> : vector<8x128xf32>
    %29 = vector.multi_reduction <add>, %28, %cst_18 [0] : vector<1x8x128xf32> to vector<8x128xf32>
    %30 = arith.addf %26, %29 : vector<8x128xf32>
    %c0_19 = arith.constant 0 : index
    %c2_20 = arith.constant 2 : index
    %c0_21 = arith.constant 0 : index
    %c0_22 = arith.constant 0 : index
    %31 = vector.load %arg6[%c0_19, %c2_20, %c0_21, %c0_22] : memref<1x8x8x128xf32, #tpu.memory_space<vmem>>, vector<1x1x8x128xf32>
    %32 = vector.shape_cast %31 : vector<1x1x8x128xf32> to vector<8x128xf32>
    %33 = vector.shape_cast %30 : vector<8x128xf32> to vector<1x1x8x128xf32>
    tpu.vector_store %arg6[%c0_19, %c2_20, %c0_21, %c0_22], %33 {strides = array<i32>} : memref<1x8x8x128xf32, #tpu.memory_space<vmem>>, vector<1x1x8x128xf32>,
    %c0_23 = arith.constant 0 : index
    %c3 = arith.constant 3 : index
    %c0_24 = arith.constant 0 : index
    %c0_25 = arith.constant 0 : index
    %34 = vector.load %arg6[%c0_23, %c3, %c0_24, %c0_25] : memref<1x8x8x128xf32, #tpu.memory_space<vmem>>, vector<1x1x8x128xf32>
    %35 = vector.shape_cast %34 : vector<1x1x8x128xf32> to vector<8x128xf32>
    %36 = vector.shape_cast %24 : vector<8x128xf32> to vector<1x8x128xf32>
    %cst_26 = arith.constant dense<0.000000e+00> : vector<8x128xf32>
    %37 = vector.multi_reduction <add>, %36, %cst_26 [0] : vector<1x8x128xf32> to vector<8x128xf32>
    %38 = arith.addf %35, %37 : vector<8x128xf32>
    %c0_27 = arith.constant 0 : index
    %c3_28 = arith.constant 3 : index
    %c0_29 = arith.constant 0 : index
    %c0_30 = arith.constant 0 : index
    %39 = vector.load %arg6[%c0_27, %c3_28, %c0_29, %c0_30] : memref<1x8x8x128xf32, #tpu.memory_space<vmem>>, vector<1x1x8x128xf32>
    %40 = vector.shape_cast %39 : vector<1x1x8x128xf32> to vector<8x128xf32>
    %41 = vector.shape_cast %38 : vector<8x128xf32> to vector<1x1x8x128xf32>
    tpu.vector_store %arg6[%c0_27, %c3_28, %c0_29, %c0_30], %41 {strides = array<i32>} : memref<1x8x8x128xf32, #tpu.memory_space<vmem>>, vector<1x1x8x128xf32>,
    %cst_31 = arith.constant 0.000000e+00 : f32
    %42 = vector.broadcast %cst_31 : f32 to vector<8x128xf32>
    %43 = arith.maximumf %12, %42 : vector<8x128xf32>
    %44 = math.log1p %16 : vector<8x128xf32>
    %45 = arith.mulf %12, %3 : vector<8x128xf32>
    %46 = arith.subf %43, %45 : vector<8x128xf32>
    %47 = arith.addf %46, %44 : vector<8x128xf32>
    %cst_32 = arith.constant 1.000000e+00 : f32
    %48 = vector.broadcast %cst_32 : f32 to vector<8x128xf32>
    %49 = arith.cmpf oeq, %3, %48 : vector<8x128xf32>
    %cst_33 = arith.constant 1.000000e+00 : f32
    %50 = vector.broadcast %cst_33 : f32 to vector<8x128xf32>
    %51 = arith.subf %50, %24 : vector<8x128xf32>
    %52 = arith.select %49, %51, %24 : vector<8x128xi1>, vector<8x128xf32>
    %cst_34 = arith.constant 5.000000e+00 : f32
    %53 = vector.broadcast %cst_34 : f32 to vector<8x128xf32>
    %54 = arith.mulf %53, %52 : vector<8x128xf32>
    %cst_35 = arith.constant 2.000000e+00 : f32
    %55 = vector.broadcast %cst_35 : f32 to vector<8x128xf32>
    %56 = arith.addf %55, %54 : vector<8x128xf32>
    %57 = arith.subf %43, %12 : vector<8x128xf32>
    %58 = arith.select %49, %43, %57 : vector<8x128xi1>, vector<8x128xf32>
    %59 = arith.addf %58, %44 : vector<8x128xf32>
    %cst_36 = arith.constant 0.000000e+00 : f32
    %60 = vector.broadcast %cst_36 : f32 to vector<8x128xf32>
    %61 = arith.subf %60, %59 : vector<8x128xf32>
    %62 = arith.mulf %56, %61 : vector<8x128xf32>
    %63 = math.exp %62 : vector<8x128xf32>
    %cst_37 = arith.constant -5.000000e-01 : f32
    %64 = vector.broadcast %cst_37 : f32 to vector<8x128xf32>
    %65 = arith.mulf %64, %3 : vector<8x128xf32>
    %cst_38 = arith.constant 7.500000e-01 : f32
    %66 = vector.broadcast %cst_38 : f32 to vector<8x128xf32>
    %67 = arith.addf %66, %65 : vector<8x128xf32>
    %c0_39 = arith.constant 0 : index
    %c0_40 = arith.constant 0 : index
    %c0_41 = arith.constant 0 : index
    %c0_42 = arith.constant 0 : index
    %68 = vector.load %arg6[%c0_39, %c0_40, %c0_41, %c0_42] : memref<1x8x8x128xf32, #tpu.memory_space<vmem>>, vector<1x1x8x128xf32>
    %69 = vector.shape_cast %68 : vector<1x1x8x128xf32> to vector<8x128xf32>
    %70 = arith.mulf %67, %63 : vector<8x128xf32>
    %71 = arith.mulf %70, %47 : vector<8x128xf32>
    %72 = vector.shape_cast %71 : vector<8x128xf32> to vector<1x8x128xf32>
    %cst_43 = arith.constant dense<0.000000e+00> : vector<8x128xf32>
    %73 = vector.multi_reduction <add>, %72, %cst_43 [0] : vector<1x8x128xf32> to vector<8x128xf32>
    %74 = arith.addf %69, %73 : vector<8x128xf32>
    %c0_44 = arith.constant 0 : index
    %c0_45 = arith.constant 0 : index
    %c0_46 = arith.constant 0 : index
    %c0_47 = arith.constant 0 : index
    %75 = vector.load %arg6[%c0_44, %c0_45, %c0_46, %c0_47] : memref<1x8x8x128xf32, #tpu.memory_space<vmem>>, vector<1x1x8x128xf32>
    %76 = vector.shape_cast %75 : vector<1x1x8x128xf32> to vector<8x128xf32>
    %77 = vector.shape_cast %74 : vector<8x128xf32> to vector<1x1x8x128xf32>
    tpu.vector_store %arg6[%c0_44, %c0_45, %c0_46, %c0_47], %77 {strides = array<i32>} : memref<1x8x8x128xf32, #tpu.memory_space<vmem>>, vector<1x1x8x128xf32>,
    %c0_48 = arith.constant 0 : index
    %c0_49 = arith.constant 0 : index
    %78 = vector.load %arg4[%c0_48, %c0_49] : memref<8x128xf32, #tpu.memory_space<vmem>>, vector<8x128xf32>
    %79 = math.absf %78 : vector<8x128xf32>
    %cst_50 = arith.constant 0.000000e+00 : f32
    %80 = vector.broadcast %cst_50 : f32 to vector<8x128xf32>
    %81 = arith.subf %80, %79 : vector<8x128xf32>
    %82 = math.exp %81 : vector<8x128xf32>
    %cst_51 = arith.constant 1.000000e+00 : f32
    %83 = vector.broadcast %cst_51 : f32 to vector<8x128xf32>
    %84 = arith.addf %83, %82 : vector<8x128xf32>
    %cst_52 = arith.constant 1.000000e+00 : f32
    %85 = vector.broadcast %cst_52 : f32 to vector<8x128xf32>
    %86 = arith.divf %85, %84 : vector<8x128xf32>
    %cst_53 = arith.constant 0.000000e+00 : f32
    %87 = vector.broadcast %cst_53 : f32 to vector<8x128xf32>
    %88 = arith.cmpf oge, %78, %87 : vector<8x128xf32>
    %89 = arith.mulf %82, %86 : vector<8x128xf32>
    %90 = arith.select %88, %86, %89 : vector<8x128xi1>, vector<8x128xf32>
    %c0_54 = arith.constant 0 : index
    %c4 = arith.constant 4 : index
    %c0_55 = arith.constant 0 : index
    %c0_56 = arith.constant 0 : index
    %91 = vector.load %arg6[%c0_54, %c4, %c0_55, %c0_56] : memref<1x8x8x128xf32, #tpu.memory_space<vmem>>, vector<1x1x8x128xf32>
    %92 = vector.shape_cast %91 : vector<1x1x8x128xf32> to vector<8x128xf32>
    %93 = arith.mulf %90, %3 : vector<8x128xf32>
    %94 = vector.shape_cast %93 : vector<8x128xf32> to vector<1x8x128xf32>
    %cst_57 = arith.constant dense<0.000000e+00> : vector<8x128xf32>
    %95 = vector.multi_reduction <add>, %94, %cst_57 [0] : vector<1x8x128xf32> to vector<8x128xf32>
    %96 = arith.addf %92, %95 : vector<8x128xf32>
    %c0_58 = arith.constant 0 : index
    %c4_59 = arith.constant 4 : index
    %c0_60 = arith.constant 0 : index
    %c0_61 = arith.constant 0 : index
    %97 = vector.load %arg6[%c0_58, %c4_59, %c0_60, %c0_61] : memref<1x8x8x128xf32, #tpu.memory_space<vmem>>, vector<1x1x8x128xf32>
    %98 = vector.shape_cast %97 : vector<1x1x8x128xf32> to vector<8x128xf32>
    %99 = vector.shape_cast %96 : vector<8x128xf32> to vector<1x1x8x128xf32>
    tpu.vector_store %arg6[%c0_58, %c4_59, %c0_60, %c0_61], %99 {strides = array<i32>} : memref<1x8x8x128xf32, #tpu.memory_space<vmem>>, vector<1x1x8x128xf32>,
    %c0_62 = arith.constant 0 : index
    %c5 = arith.constant 5 : index
    %c0_63 = arith.constant 0 : index
    %c0_64 = arith.constant 0 : index
    %100 = vector.load %arg6[%c0_62, %c5, %c0_63, %c0_64] : memref<1x8x8x128xf32, #tpu.memory_space<vmem>>, vector<1x1x8x128xf32>
    %101 = vector.shape_cast %100 : vector<1x1x8x128xf32> to vector<8x128xf32>
    %102 = vector.shape_cast %90 : vector<8x128xf32> to vector<1x8x128xf32>
    %cst_65 = arith.constant dense<0.000000e+00> : vector<8x128xf32>
    %103 = vector.multi_reduction <add>, %102, %cst_65 [0] : vector<1x8x128xf32> to vector<8x128xf32>
    %104 = arith.addf %101, %103 : vector<8x128xf32>
    %c0_66 = arith.constant 0 : index
    %c5_67 = arith.constant 5 : index
    %c0_68 = arith.constant 0 : index
    %c0_69 = arith.constant 0 : index
    %105 = vector.load %arg6[%c0_66, %c5_67, %c0_68, %c0_69] : memref<1x8x8x128xf32, #tpu.memory_space<vmem>>, vector<1x1x8x128xf32>
    %106 = vector.shape_cast %105 : vector<1x1x8x128xf32> to vector<8x128xf32>
    %107 = vector.shape_cast %104 : vector<8x128xf32> to vector<1x1x8x128xf32>
    tpu.vector_store %arg6[%c0_66, %c5_67, %c0_68, %c0_69], %107 {strides = array<i32>} : memref<1x8x8x128xf32, #tpu.memory_space<vmem>>, vector<1x1x8x128xf32>,
    %c0_70 = arith.constant 0 : index
    %c0_71 = arith.constant 0 : index
    %108 = vector.load %arg5[%c0_70, %c0_71] : memref<8x128xf32, #tpu.memory_space<vmem>>, vector<8x128xf32>
    %109 = math.absf %108 : vector<8x128xf32>
    %cst_72 = arith.constant 0.000000e+00 : f32
    %110 = vector.broadcast %cst_72 : f32 to vector<8x128xf32>
    %111 = arith.subf %110, %109 : vector<8x128xf32>
    %112 = math.exp %111 : vector<8x128xf32>
    %cst_73 = arith.constant 1.000000e+00 : f32
    %113 = vector.broadcast %cst_73 : f32 to vector<8x128xf32>
    %114 = arith.addf %113, %112 : vector<8x128xf32>
    %cst_74 = arith.constant 1.000000e+00 : f32
    %115 = vector.broadcast %cst_74 : f32 to vector<8x128xf32>
    %116 = arith.divf %115, %114 : vector<8x128xf32>
    %cst_75 = arith.constant 0.000000e+00 : f32
    %117 = vector.broadcast %cst_75 : f32 to vector<8x128xf32>
    %118 = arith.cmpf oge, %108, %117 : vector<8x128xf32>
    %119 = arith.mulf %112, %116 : vector<8x128xf32>
    %120 = arith.select %118, %116, %119 : vector<8x128xi1>, vector<8x128xf32>
    %c0_76 = arith.constant 0 : index
    %c6 = arith.constant 6 : index
    %c0_77 = arith.constant 0 : index
    %c0_78 = arith.constant 0 : index
    %121 = vector.load %arg6[%c0_76, %c6, %c0_77, %c0_78] : memref<1x8x8x128xf32, #tpu.memory_space<vmem>>, vector<1x1x8x128xf32>
    %122 = vector.shape_cast %121 : vector<1x1x8x128xf32> to vector<8x128xf32>
    %123 = arith.mulf %120, %3 : vector<8x128xf32>
    %124 = vector.shape_cast %123 : vector<8x128xf32> to vector<1x8x128xf32>
    %cst_79 = arith.constant dense<0.000000e+00> : vector<8x128xf32>
    %125 = vector.multi_reduction <add>, %124, %cst_79 [0] : vector<1x8x128xf32> to vector<8x128xf32>
    %126 = arith.addf %122, %125 : vector<8x128xf32>
    %c0_80 = arith.constant 0 : index
    %c6_81 = arith.constant 6 : index
    %c0_82 = arith.constant 0 : index
    %c0_83 = arith.constant 0 : index
    %127 = vector.load %arg6[%c0_80, %c6_81, %c0_82, %c0_83] : memref<1x8x8x128xf32, #tpu.memory_space<vmem>>, vector<1x1x8x128xf32>
    %128 = vector.shape_cast %127 : vector<1x1x8x128xf32> to vector<8x128xf32>
    %129 = vector.shape_cast %126 : vector<8x128xf32> to vector<1x1x8x128xf32>
    tpu.vector_store %arg6[%c0_80, %c6_81, %c0_82, %c0_83], %129 {strides = array<i32>} : memref<1x8x8x128xf32, #tpu.memory_space<vmem>>, vector<1x1x8x128xf32>,
    %c0_84 = arith.constant 0 : index
    %c7 = arith.constant 7 : index
    %c0_85 = arith.constant 0 : index
    %c0_86 = arith.constant 0 : index
    %130 = vector.load %arg6[%c0_84, %c7, %c0_85, %c0_86] : memref<1x8x8x128xf32, #tpu.memory_space<vmem>>, vector<1x1x8x128xf32>
    %131 = vector.shape_cast %130 : vector<1x1x8x128xf32> to vector<8x128xf32>
    %132 = vector.shape_cast %120 : vector<8x128xf32> to vector<1x8x128xf32>
    %cst_87 = arith.constant dense<0.000000e+00> : vector<8x128xf32>
    %133 = vector.multi_reduction <add>, %132, %cst_87 [0] : vector<1x8x128xf32> to vector<8x128xf32>
    %134 = arith.addf %131, %133 : vector<8x128xf32>
    %c0_88 = arith.constant 0 : index
    %c7_89 = arith.constant 7 : index
    %c0_90 = arith.constant 0 : index
    %c0_91 = arith.constant 0 : index
    %135 = vector.load %arg6[%c0_88, %c7_89, %c0_90, %c0_91] : memref<1x8x8x128xf32, #tpu.memory_space<vmem>>, vector<1x1x8x128xf32>
    %136 = vector.shape_cast %135 : vector<1x1x8x128xf32> to vector<8x128xf32>
    %137 = vector.shape_cast %134 : vector<8x128xf32> to vector<1x1x8x128xf32>
    tpu.vector_store %arg6[%c0_88, %c7_89, %c0_90, %c0_91], %137 {strides = array<i32>} : memref<1x8x8x128xf32, #tpu.memory_space<vmem>>, vector<1x1x8x128xf32>,
    return
  }
  func.func @transform_0(%arg0: i32, %arg1: i32) -> (i32, i32) {
    %c1_i32 = arith.constant 1 : i32
    %0 = arith.muli %arg0, %c1_i32 : i32
    %1 = arith.addi %0, %arg1 : i32
    %c0_i32 = arith.constant 0 : i32
    %c0_i32_0 = arith.constant 0 : i32
    return %1, %c0_i32 : i32, i32
  }
  func.func @transform_1(%arg0: i32, %arg1: i32) -> (i32, i32) {
    %c1_i32 = arith.constant 1 : i32
    %0 = arith.muli %arg0, %c1_i32 : i32
    %1 = arith.addi %0, %arg1 : i32
    %c0_i32 = arith.constant 0 : i32
    %c0_i32_0 = arith.constant 0 : i32
    return %1, %c0_i32 : i32, i32
  }
  func.func @transform_2(%arg0: i32, %arg1: i32) -> (i32, i32) {
    %c1_i32 = arith.constant 1 : i32
    %0 = arith.muli %arg0, %c1_i32 : i32
    %1 = arith.addi %0, %arg1 : i32
    %c0_i32 = arith.constant 0 : i32
    %c0_i32_0 = arith.constant 0 : i32
    return %1, %c0_i32 : i32, i32
  }
  func.func @transform_3(%arg0: i32, %arg1: i32) -> (i32, i32) {
    %c1_i32 = arith.constant 1 : i32
    %0 = arith.muli %arg0, %c1_i32 : i32
    %1 = arith.addi %0, %arg1 : i32
    %c0_i32 = arith.constant 0 : i32
    %c0_i32_0 = arith.constant 0 : i32
    return %1, %c0_i32 : i32, i32
  }
  func.func @transform_4(%arg0: i32, %arg1: i32) -> (i32, i32, i32, i32) {
    %c0_i32 = arith.constant 0 : i32
    %c0_i32_0 = arith.constant 0 : i32
    %c0_i32_1 = arith.constant 0 : i32
    %c0_i32_2 = arith.constant 0 : i32
    return %arg0, %c0_i32, %c0_i32_0, %c0_i32_1 : i32, i32, i32, i32
  }
}

</mosaic_0001>

<llo_original>
// kernel: multi_stage_loss.1
$region0: #{multi_stage_loss.1}
  #allocation0 [shape = 'u32[]', space=smem, size = 0x4, offset = 0x4, fixed_abs, tag = 'smem constant byte address 0x4 - core index']
  #allocation1 [shape = 'u32[144,128]{1,0:T(1,128)}', space=vmem, size = 0x12000, scoped, tag = 'internal scratch']
  %s0 = inlined_call_operand.vmem [shape: f32[16,128], index: 0, kind: input, shape index: {}]
  %s1 = inlined_call_operand.vmem [shape: f32[16,128], index: 1, kind: input, shape index: {}]
  %s2 = inlined_call_operand.vmem [shape: f32[16,128], index: 2, kind: input, shape index: {}]
  %s3 = inlined_call_operand.vmem [shape: f32[16,128], index: 3, kind: input, shape index: {}]
  %s4 = inlined_call_operand.vmem [shape: f32[2,8,8,128], index: 4, kind: output, shape index: {}]
  %s5 = sld [smem:[#allocation0]]
  $region53: #{multi_stage_loss.1} parent=0
    _
  %s7 = ssub.s32 1, %s5
  %s8 = scalar_select 0, %s7, %s5
  loop: start=0, step=1, limit=4
  $region2: #{multi_stage_loss.1} parent=0 // loop_pre_header
    _
  $region3: #{multi_stage_loss.1} parent=0 // loop_header
    %s10 = sphi 0, %s14
    %p11 = scmp.ge.s32.totalorder %s10, 4
    %s17 = sphi 0, %s29
    %s18 = sphi 0, %s25
    %s19 = sphi 0, %s17
    %s20 = sphi 0, %s18
    %s21 = sphi 0, %s19
    %s22 = sphi 0, %s20
    %s34 = sphi 0, %s36
    %s37 = sphi 0, %s34
    %s38 = sphi 0, %s37
    %s54 = sphi 0, %s38
    %s62 = sphi 0, %s64
    %s65 = sphi 0, %s62
    %s66 = sphi 0, %s65
    %s82 = sphi 0, %s66
    %s90 = sphi 0, %s92
    %s93 = sphi 0, %s90
    %s94 = sphi 0, %s93
    %s110 = sphi 0, %s94
    %s118 = sphi 0, %s120
    %s121 = sphi 0, %s118
    %s122 = sphi 0, %s121
    %s138 = sphi 0, %s122
    %s144 = sphi 0, %s146
    %s147 = sphi 0, %s144
    %s148 = sphi 0, %s147
    %s164 = sphi 0, %s148
  $region4: #{multi_stage_loss.1} parent=0 // loop_header_branch
    %13 = sbr.rel (%p11) target = $region8
  $region5: #{multi_stage_loss.1} parent=0 // loop_body
    %s15 = ssub.s32 %s10, 1
    %s16 = ssub.s32 %s10, 2
    %s23 = sadd.s32 1, %s18
    %p24 = scmp.ge.s32.totalorder %s23, 1
    %s25 = scalar_select %p24, 0, %s23
    %s26 = sadd.s32 1, %s17
    %s27 = scalar_select %p24, %s26, %s17
    %p28 = scmp.ge.s32.totalorder %s27, 2
    %s29 = scalar_select %p28, 0, %s27
    %s30 = sadd.s32 %s17, %s18
    %s31 = sadd.s32 %s29, %s25
    %s32 = ssub.s32 %s30, %s31
    %p33 = scmp.eq.s32.totalorder %s32, 0
    %s35 = sadd.s32 %s34, 1
    %s36 = scalar_select %p33, %s34, %s35
    %p39 = pneg %p33
    %p40 = scmp.eq.s32.totalorder %s10, 1
    %p41 = por %p39, %p40
    %p42 = scmp.ne.s32.totalorder %s34, %s37
    %p43 = scmp.eq.s32.totalorder %s10, 0
    %p44 = por %p42, %p43
    %p45 = scmp.ne.s32.totalorder %s34, %s37
    %p46 = scmp.eq.s32.totalorder %s15, 1
    %p47 = por %p45, %p46
    %p48 = scmp.ne.s32.totalorder %s37, %s38
    %p49 = scmp.eq.s32.totalorder %s15, 0
    %p50 = por %p48, %p49
    %p51 = scmp.ne.s32.totalorder %s37, %s38
    %p52 = scmp.eq.s32.totalorder %s16, 1
    %p53 = por %p51, %p52
    %p55 = scmp.ne.s32.totalorder %s38, %s54
    %p56 = scmp.eq.s32.totalorder %s16, 0
    %p57 = por %p55, %p56
    %s58 = sadd.s32 %s17, %s18
    %s59 = sadd.s32 %s29, %s25
    %s60 = ssub.s32 %s58, %s59
    %p61 = scmp.eq.s32.totalorder %s60, 0
    %s63 = sadd.s32 %s62, 1
    %s64 = scalar_select %p61, %s62, %s63
    %p67 = pneg %p61
    %p68 = scmp.eq.s32.totalorder %s10, 1
    %p69 = por %p67, %p68
    %p70 = scmp.ne.s32.totalorder %s62, %s65
    %p71 = scmp.eq.s32.totalorder %s10, 0
    %p72 = por %p70, %p71
    %p73 = scmp.ne.s32.totalorder %s62, %s65
    %p74 = scmp.eq.s32.totalorder %s15, 1
    %p75 = por %p73, %p74
    %p76 = scmp.ne.s32.totalorder %s65, %s66
    %p77 = scmp.eq.s32.totalorder %s15, 0
    %p78 = por %p76, %p77
    %p79 = scmp.ne.s32.totalorder %s65, %s66
    %p80 = scmp.eq.s32.totalorder %s16, 1
    %p81 = por %p79, %p80
    %p83 = scmp.ne.s32.totalorder %s66, %s82
    %p84 = scmp.eq.s32.totalorder %s16, 0
    %p85 = por %p83, %p84
    %s86 = sadd.s32 %s17, %s18
    %s87 = sadd.s32 %s29, %s25
    %s88 = ssub.s32 %s86, %s87
    %p89 = scmp.eq.s32.totalorder %s88, 0
    %s91 = sadd.s32 %s90, 1
    %s92 = scalar_select %p89, %s90, %s91
    %p95 = pneg %p89
    %p96 = scmp.eq.s32.totalorder %s10, 1
    %p97 = por %p95, %p96
    %p98 = scmp.ne.s32.totalorder %s90, %s93
    %p99 = scmp.eq.s32.totalorder %s10, 0
    %p100 = por %p98, %p99
    %p101 = scmp.ne.s32.totalorder %s90, %s93
    %p102 = scmp.eq.s32.totalorder %s15, 1
    %p103 = por %p101, %p102
    %p104 = scmp.ne.s32.totalorder %s93, %s94
    %p105 = scmp.eq.s32.totalorder %s15, 0
    %p106 = por %p104, %p105
    %p107 = scmp.ne.s32.totalorder %s93, %s94
    %p108 = scmp.eq.s32.totalorder %s16, 1
    %p109 = por %p107, %p108
    %p111 = scmp.ne.s32.totalorder %s94, %s110
    %p112 = scmp.eq.s32.totalorder %s16, 0
    %p113 = por %p111, %p112
    %s114 = sadd.s32 %s17, %s18
    %s115 = sadd.s32 %s29, %s25
    %s116 = ssub.s32 %s114, %s115
    %p117 = scmp.eq.s32.totalorder %s116, 0
    %s119 = sadd.s32 %s118, 1
    %s120 = scalar_select %p117, %s118, %s119
    %p123 = pneg %p117
    %p124 = scmp.eq.s32.totalorder %s10, 1
    %p125 = por %p123, %p124
    %p126 = scmp.ne.s32.totalorder %s118, %s121
    %p127 = scmp.eq.s32.totalorder %s10, 0
    %p128 = por %p126, %p127
    %p129 = scmp.ne.s32.totalorder %s118, %s121
    %p130 = scmp.eq.s32.totalorder %s15, 1
    %p131 = por %p129, %p130
    %p132 = scmp.ne.s32.totalorder %s121, %s122
    %p133 = scmp.eq.s32.totalorder %s15, 0
    %p134 = por %p132, %p133
    %p135 = scmp.ne.s32.totalorder %s121, %s122
    %p136 = scmp.eq.s32.totalorder %s16, 1
    %p137 = por %p135, %p136
    %p139 = scmp.ne.s32.totalorder %s122, %s138
    %p140 = scmp.eq.s32.totalorder %s16, 0
    %p141 = por %p139, %p140
    %s142 = ssub.s32 %s17, %s29
    %p143 = scmp.eq.s32.totalorder %s142, 0
    %s145 = sadd.s32 %s144, 1
    %s146 = scalar_select %p143, %s144, %s145
    %p149 = pneg %p143
    %p150 = scmp.eq.s32.totalorder %s10, 1
    %p151 = por %p149, %p150
    %p152 = scmp.ne.s32.totalorder %s144, %s147
    %p153 = scmp.eq.s32.totalorder %s10, 0
    %p154 = por %p152, %p153
    %p155 = scmp.ne.s32.totalorder %s144, %s147
    %p156 = scmp.eq.s32.totalorder %s15, 1
    %p157 = por %p155, %p156
    %p158 = scmp.ne.s32.totalorder %s147, %s148
    %p159 = scmp.eq.s32.totalorder %s15, 0
    %p160 = por %p158, %p159
    %p161 = scmp.ne.s32.totalorder %s147, %s148
    %p162 = scmp.eq.s32.totalorder %s16, 1
    %p163 = por %p161, %p162
    %p165 = scmp.ne.s32.totalorder %s148, %s164
    %p166 = scmp.eq.s32.totalorder %s16, 0
    %p167 = por %p165, %p166
    %p168 = scmp.le.s32.totalorder 1, %s10
    %p169 = scmp.lt.s32.totalorder %s10, 3
    %p170 = pnand %p168, %p169
    %p171 = pneg %p170
    // Predicated region
    $region9: #{multi_stage_loss.1} parent=5 // pred_check
      _
    $region10: #{multi_stage_loss.1} parent=5 // pred_check_branch
      %173 = sbr.rel (%p170) target = $region12
    $region11: #{multi_stage_loss.1} parent=5 // pred_region
      %s174 = ssub.s32 %s10, 1
    $region12: #{multi_stage_loss.1} parent=5 // pred_fallthru
      _
    %p175 = scmp.lt.s32.totalorder %s10, 2
    // Predicated region
    $region13: #{multi_stage_loss.1} parent=5 // pred_check
      %p176 = pneg %p175
    $region14: #{multi_stage_loss.1} parent=5 // pred_check_branch
      %178 = sbr.rel (%p176) target = $region16
    $region15: #{multi_stage_loss.1} parent=5 // pred_region
      // Predicated region
      $region17: #{multi_stage_loss.1} parent=15 // pred_check
        %p179 = pneg %p44
      $region18: #{multi_stage_loss.1} parent=15 // pred_check_branch
        %181 = sbr.rel (%p179) target = $region20
      $region19: #{multi_stage_loss.1} parent=15 // pred_region
        %s182 = sadd.s32 %s17, %s18
        %p183 = scmp.lt.s32.totalorder %s182, 1
        %s184 = scalar_select %p183, %s182, 1
        %s185 = smul.addr %s184, 8
        %s186 = scalar_lea.vmem %s0, %s185
        %s187 = sadd.s32 %s17, %s18
      $region20: #{multi_stage_loss.1} parent=15 // pred_fallthru
        _
      // Predicated region
      $region21: #{multi_stage_loss.1} parent=15 // pred_check
        %p188 = pneg %p72
      $region22: #{multi_stage_loss.1} parent=15 // pred_check_branch
        %190 = sbr.rel (%p188) target = $region24
      $region23: #{multi_stage_loss.1} parent=15 // pred_region
        %s191 = sadd.s32 %s17, %s18
        %p192 = scmp.lt.s32.totalorder %s191, 1
        %s193 = scalar_select %p192, %s191, 1
        %s194 = smul.addr %s193, 8
        %s195 = scalar_lea.vmem %s1, %s194
        %s196 = sadd.s32 %s17, %s18
      $region24: #{multi_stage_loss.1} parent=15 // pred_fallthru
        _
      // Predicated region
      $region25: #{multi_stage_loss.1} parent=15 // pred_check
        %p197 = pneg %p100
      $region26: #{multi_stage_loss.1} parent=15 // pred_check_branch
        %199 = sbr.rel (%p197) target = $region28
      $region27: #{multi_stage_loss.1} parent=15 // pred_region
        %s200 = sadd.s32 %s17, %s18
        %p201 = scmp.lt.s32.totalorder %s200, 1
        %s202 = scalar_select %p201, %s200, 1
        %s203 = smul.addr %s202, 8
        %s204 = scalar_lea.vmem %s2, %s203
        %s205 = sadd.s32 %s17, %s18
      $region28: #{multi_stage_loss.1} parent=15 // pred_fallthru
        _
      // Predicated region
      $region29: #{multi_stage_loss.1} parent=15 // pred_check
        %p206 = pneg %p128
      $region30: #{multi_stage_loss.1} parent=15 // pred_check_branch
        %208 = sbr.rel (%p206) target = $region32
      $region31: #{multi_stage_loss.1} parent=15 // pred_region
        %s209 = sadd.s32 %s17, %s18
        %p210 = scmp.lt.s32.totalorder %s209, 1
        %s211 = scalar_select %p210, %s209, 1
        %s212 = smul.addr %s211, 8
        %s213 = scalar_lea.vmem %s3, %s212
        %s214 = sadd.s32 %s17, %s18
      $region32: #{multi_stage_loss.1} parent=15 // pred_fallthru
        _
    $region16: #{multi_stage_loss.1} parent=5 // pred_fallthru
      _
    %p215 = scmp.le.s32.totalorder 1, %s10
    %p216 = scmp.lt.s32.totalorder %s10, 3
    %p217 = pnand %p215, %p216
    %p218 = pneg %p217
    // Predicated region
    $region33: #{multi_stage_loss.1} parent=5 // pred_check
      _
    $region34: #{multi_stage_loss.1} parent=5 // pred_check_branch
      %220 = sbr.rel (%p217) target = $region36
    $region35: #{multi_stage_loss.1} parent=5 // pred_region
      %s221 = ssub.s32 %s10, 1
      %s222 = sadd.s32 %s19, %s20
      %p223 = scmp.lt.s32.totalorder %s222, 1
      %s224 = scalar_select %p223, %s222, 1
      %s225 = smul.addr %s224, 8
      %s226 = scalar_lea.vmem %s0, %s225
      %p227 = pneg %p50
      %p228 = pneg %p47
      %s229 = sadd.s32 %s19, %s20
      %p230 = scmp.lt.s32.totalorder %s229, 1
      %s231 = scalar_select %p230, %s229, 1
      %s232 = smul.addr %s231, 8
      %s233 = scalar_lea.vmem %s1, %s232
      %p234 = pneg %p78
      %p235 = pneg %p75
      %s236 = sadd.s32 %s19, %s20
      %p237 = scmp.lt.s32.totalorder %s236, 1
      %s238 = scalar_select %p237, %s236, 1
      %s239 = smul.addr %s238, 8
      %s240 = scalar_lea.vmem %s2, %s239
      %p241 = pneg %p106
      %p242 = pneg %p103
      %s243 = sadd.s32 %s19, %s20
      %p244 = scmp.lt.s32.totalorder %s243, 1
      %s245 = scalar_select %p244, %s243, 1
      %s246 = smul.addr %s245, 8
      %s247 = scalar_lea.vmem %s3, %s246
      %p248 = pneg %p134
      %p249 = pneg %p131
      %p250 = pneg %p160
      %p251 = pneg %p157
      %p252 = scmp.lt.s32.totalorder %s19, 1
      %s253 = scalar_select %p252, %s19, 1
      %s254 = smul.addr %s253, 8
      %s255 = smul.addr %s254, 8
      %s256 = scalar_lea.vmem %s4, %s255
      %s257 = sadd.s32 %s19, %s20
      %p258 = scmp.lt.s32.totalorder %s257, 1
      %s259 = scalar_select %p258, %s257, 1
      %s260 = smul.addr %s259, 8
      %s261 = scalar_lea.vmem %s0, %s260
      %s262 = sadd.s32 %s19, %s20
      %s263 = sadd.s32 %s19, %s20
      %p264 = scmp.lt.s32.totalorder %s263, 1
      %s265 = scalar_select %p264, %s263, 1
      %s266 = smul.addr %s265, 8
      %s267 = scalar_lea.vmem %s1, %s266
      %s268 = sadd.s32 %s19, %s20
      %s269 = sadd.s32 %s19, %s20
      %p270 = scmp.lt.s32.totalorder %s269, 1
      %s271 = scalar_select %p270, %s269, 1
      %s272 = smul.addr %s271, 8
      %s273 = scalar_lea.vmem %s2, %s272
      %s274 = sadd.s32 %s19, %s20
      %s275 = sadd.s32 %s19, %s20
      %p276 = scmp.lt.s32.totalorder %s275, 1
      %s277 = scalar_select %p276, %s275, 1
      %s278 = smul.addr %s277, 8
      %s279 = scalar_lea.vmem %s3, %s278
      %s280 = sadd.s32 %s19, %s20
      %p281 = scmp.lt.s32.totalorder %s19, 1
      %s282 = scalar_select %p281, %s19, 1
      %s283 = smul.addr %s282, 8
      %s284 = smul.addr %s283, 8
      %s285 = scalar_lea.vmem %s4, %s284
      %p286 = scmp.eq.s32.totalorder %s20, 0
      // Predicated region
      $region37: #{multi_stage_loss.1} parent=35 // pred_check
        %p287 = pneg %p286
      $region38: #{multi_stage_loss.1} parent=35 // pred_check_branch
        %289 = sbr.rel (%p287) target = $region40
      $region39: #{multi_stage_loss.1} parent=35 // pred_region
        %290 = vst [vmem:[%s285] sm:$0xff] 0.0
        %291 = vst [vmem:[%s285 + $0x8] sm:$0xff] 0.0
        %292 = vst [vmem:[%s285 + $0x10] sm:$0xff] 0.0
        %293 = vst [vmem:[%s285 + $0x18] sm:$0xff] 0.0
        %294 = vst [vmem:[%s285 + $0x20] sm:$0xff] 0.0
        %295 = vst [vmem:[%s285 + $0x28] sm:$0xff] 0.0
        %296 = vst [vmem:[%s285 + $0x30] sm:$0xff] 0.0
        %297 = vst [vmem:[%s285 + $0x38] sm:$0xff] 0.0
      $region40: #{multi_stage_loss.1} parent=35 // pred_fallthru
        _
      %v298 = vld [vmem:[%s261] sm:$0xff]
      %s299 = scalar_lea.vmem %s285, 8
      %v300 = vld [vmem:[%s299] sm:$0xff]
      %v301 = vadd.f32 %v298, 0.0
      %v302 = vadd.f32 %v300, %v301
      %303 = vst [vmem:[%s299] sm:$0xff] %v302
      %v304 = vld [vmem:[%s267] sm:$0xff]
      %v305 = vand.u32 2147483647, %v304
      %v306 = vsub.f32 0.0, %v305
      %v307 = vmul.f32 %v306, 1.442695
      %v308 = vpow.pop %v307
      %v309 = vadd.f32 %v308, 1.0
      %v310 = vrcp.pop %v309
      %v311 = vmul.f32 1.0, %v310
      %vm312 = vcmp.ge.f32.partialorder %v304, 0.0
      %v313 = vmul.f32 %v308, %v311
      %v314 = vsel %vm312, %v311, %v313
      %s315 = scalar_lea.vmem %s285, 16
      %v316 = vld [vmem:[%s315] sm:$0xff]
      %v317 = vmul.f32 %v314, %v298
      %v318 = vadd.f32 %v317, 0.0
      %v319 = vadd.f32 %v316, %v318
      %320 = vst [vmem:[%s315] sm:$0xff] %v319
      %s321 = scalar_lea.vmem %s285, 24
      %v322 = vld [vmem:[%s321] sm:$0xff]
      %v323 = vadd.f32 %v314, 0.0
      %v324 = vadd.f32 %v322, %v323
      %325 = vst [vmem:[%s321] sm:$0xff] %v324
      %v326 = vmax.f32 %v304, 0.0
      %v327 = vadd.f32 %v308, 1.0
      %v328 = vlog2.pop %v327
      %v329 = vmul.f32 %v328, 0.6931472
      %v330 = vmul.f32 -0.5, %v308
      %v331 = vadd.f32 %v330, 1.0
      %v332 = vmul.f32 %v331, %v308
      %v333 = vand.u32 2147483647, %v308
      %vm334 = vcmp.lt.f32.partialorder %v333, 0.0004427343
      %v335 = vsel %vm334, %v332, %v329
      %v336 = vmul.f32 %v304, %v298
      %v337 = vsub.f32 %v326, %v336
      %v338 = vadd.f32 %v337, %v335
      %vm339 = vcmp.eq.f32.partialorder %v298, 1.0
      %v340 = vsub.f32 1.0, %v314
      %v341 = vsel %vm339, %v340, %v314
      %v342 = vmul.f32 %v341, 5.0
      %v343 = vadd.f32 %v342, 2.0
      %v344 = vsub.f32 %v326, %v304
      %v345 = vsel %vm339, %v326, %v344
      %v346 = vadd.f32 %v345, %v335
      %v347 = vsub.f32 0.0, %v346
      %v348 = vmul.f32 %v343, %v347
      %v349 = vmul.f32 %v348, 1.442695
      %v350 = vpow.pop %v349
      %v351 = vmul.f32 %v298, -0.5
      %v352 = vadd.f32 %v351, 0.75
      %v353 = vld [vmem:[%s285] sm:$0xff]
      %v354 = vmul.f32 %v352, %v350
      %v355 = vmul.f32 %v354, %v338
      %v356 = vadd.f32 %v355, 0.0
      %v357 = vadd.f32 %v353, %v356
      %358 = vst [vmem:[%s285] sm:$0xff] %v357
      %v359 = vld [vmem:[%s273] sm:$0xff]
      %v360 = vand.u32 2147483647, %v359
      %v361 = vsub.f32 0.0, %v360
      %v362 = vmul.f32 %v361, 1.442695
      %v363 = vpow.pop %v362
      %v364 = vadd.f32 %v363, 1.0
      %v365 = vrcp.pop %v364
      %v366 = vmul.f32 1.0, %v365
      %vm367 = vcmp.ge.f32.partialorder %v359, 0.0
      %v368 = vmul.f32 %v363, %v366
      %v369 = vsel %vm367, %v366, %v368
      %s370 = scalar_lea.vmem %s285, 32
      %v371 = vld [vmem:[%s370] sm:$0xff]
      %v372 = vmul.f32 %v369, %v298
      %v373 = vadd.f32 %v372, 0.0
      %v374 = vadd.f32 %v371, %v373
      %375 = vst [vmem:[%s370] sm:$0xff] %v374
      %s376 = scalar_lea.vmem %s285, 40
      %v377 = vld [vmem:[%s376] sm:$0xff]
      %v378 = vadd.f32 %v369, 0.0
      %v379 = vadd.f32 %v377, %v378
      %380 = vst [vmem:[%s376] sm:$0xff] %v379
      %v381 = vld [vmem:[%s279] sm:$0xff]
      %v382 = vand.u32 2147483647, %v381
      %v383 = vsub.f32 0.0, %v382
      %v384 = vmul.f32 %v383, 1.442695
      %v385 = vpow.pop %v384
      %v386 = vadd.f32 %v385, 1.0
      %v387 = vrcp.pop %v386
      %v388 = vmul.f32 1.0, %v387
      %vm389 = vcmp.ge.f32.partialorder %v381, 0.0
      %v390 = vmul.f32 %v385, %v388
      %v391 = vsel %vm389, %v388, %v390
      %s392 = scalar_lea.vmem %s285, 48
      %v393 = vld [vmem:[%s392] sm:$0xff]
      %v394 = vmul.f32 %v391, %v298
      %v395 = vadd.f32 %v394, 0.0
      %v396 = vadd.f32 %v393, %v395
      %397 = vst [vmem:[%s392] sm:$0xff] %v396
      %s398 = scalar_lea.vmem %s285, 56
      %v399 = vld [vmem:[%s398] sm:$0xff]
      %v400 = vadd.f32 %v391, 0.0
      %v401 = vadd.f32 %v399, %v400
      %402 = vst [vmem:[%s398] sm:$0xff] %v401
      %p403 = scmp.lt.s32.totalorder %s19, 1
      %s404 = scalar_select %p403, %s19, 1
      %s405 = smul.addr %s404, 8
      %s406 = smul.addr %s405, 8
      %s407 = scalar_lea.vmem %s4, %s406
      // Predicated region
      $region41: #{multi_stage_loss.1} parent=35 // pred_check
        %p408 = pneg %p157
      $region42: #{multi_stage_loss.1} parent=35 // pred_check_branch
        %410 = sbr.rel (%p408) target = $region44
      $region43: #{multi_stage_loss.1} parent=35 // pred_region
        _
      $region44: #{multi_stage_loss.1} parent=35 // pred_fallthru
        _
    $region36: #{multi_stage_loss.1} parent=5 // pred_fallthru
      _
    %p411 = scmp.le.s32.totalorder 2, %s10
    // Predicated region
    $region45: #{multi_stage_loss.1} parent=5 // pred_check
      %p412 = pneg %p411
    $region46: #{multi_stage_loss.1} parent=5 // pred_check_branch
      %414 = sbr.rel (%p412) target = $region48
    $region47: #{multi_stage_loss.1} parent=5 // pred_region
      %s415 = ssub.s32 %s10, 2
      // Predicated region
      $region49: #{multi_stage_loss.1} parent=47 // pred_check
        %p416 = pneg %p163
      $region50: #{multi_stage_loss.1} parent=47 // pred_check_branch
        %418 = sbr.rel (%p416) target = $region52
      $region51: #{multi_stage_loss.1} parent=47 // pred_region
        %p419 = scmp.lt.s32.totalorder %s21, 1
        %s420 = scalar_select %p419, %s21, 1
        %s421 = smul.addr %s420, 8
        %s422 = smul.addr %s421, 8
        %s423 = scalar_lea.vmem %s4, %s422
      $region52: #{multi_stage_loss.1} parent=47 // pred_fallthru
        _
    $region48: #{multi_stage_loss.1} parent=5 // pred_fallthru
      _
  $region6: #{multi_stage_loss.1} parent=0 // loop_footer
    %s14 = sadd.s32 1, %s10
  $region7: #{multi_stage_loss.1} parent=0 // loop_footer_branch
    %9 = sbr.rel target = $region3
  $region8: #{multi_stage_loss.1} parent=0 // loop_exit
    _

</llo_original>
